<compile_context>
chip_gen: v7x
topology: tpu7x:2x2x1
jax: 0.10.0
libtpu: 0.0.40
codegen_flags: <defaults>
</compile_context>

<pallas_src>
import functools

import jax
import jax.numpy as jnp
from jax.experimental import pallas as pl
from jax.experimental.pallas import tpu as pltpu

IN_FEATURES = 4
IN_PAD = 8          # first-layer K padded to 8 lanes
HIDDEN = 128
OUT_FEATURES = 2
NUM_HIDDEN_MM = 4   # the four 128x128 matmuls after the first layer


def _round_up(x, m):
    return ((x + m - 1) // m) * m


def _device_kind():
    try:
        return jax.devices()[0].device_kind.lower()
    except Exception:  # pragma: no cover - defensive only
        return ""


def _elementwise_dtype():
    """bf16 bias-add/ReLU on v6e/v7x (bf16 VALU); f32 on v5e and older."""
    kind = _device_kind()
    if ("v6" in kind) or ("v7" in kind):
        return jnp.bfloat16
    return jnp.float32


def _num_tensorcores():
    """v7x has 2 TensorCores per chip; earlier generations have 1."""
    return 2 if "v7" in _device_kind() else 1


def _choose_tile(batch, batch_tile, num_cores):
    """Pick a batch tile: as large as possible without over-padding, but with
    >= num_cores grid steps on megacore parts when the batch is big enough."""
    b8 = _round_up(max(batch, 1), 8)
    # Don't over-pad small batches: never exceed the (rounded) batch itself.
    tile = min(batch_tile, _round_up(b8, 256) if b8 >= 256 else b8)
    # v7x megacore: keep >= num_cores "parallel" grid steps when worth splitting.
    if num_cores > 1 and b8 >= 128:
        per_core = _round_up(pl.cdiv(b8, num_cores), 256 if b8 >= 512 else 8)
        tile = min(tile, per_core)
    # Alignment: multiples of 256 for large tiles, 8 (sublane) for small ones.
    if tile >= 256:
        tile = (tile // 256) * 256
    else:
        tile = max(8, (tile // 8) * 8)
    return tile


def actor_kernel(x_ref, w1_ref, wh_ref, bh_ref, w6_ref, b6_ref, out_ref,
                 *, compute_dtype):
    """Full 6-layer MLP for one batch tile, entirely in VMEM.

    x_ref : (tile, IN_PAD)        f32
    w1_ref: (IN_PAD, HIDDEN)      bf16
    wh_ref: (4, HIDDEN, HIDDEN)   bf16   (stacked hidden-layer weights)
    bh_ref: (5, HIDDEN)           compute_dtype (stacked first-five biases)
    w6_ref: (HIDDEN, OUT_FEATURES) bf16
    b6_ref: (1, OUT_FEATURES)     f32
    out_ref:(tile, OUT_FEATURES)  f32
    """
    biases = bh_ref[...]                               # (5, HIDDEN), compute_dtype

    def hidden_layer(h_bf16, w, b_row):
        # bf16 x bf16 on the MXU, f32 accumulation; one cast out of the f32
        # accumulator, then bias add + ReLU in compute_dtype (bf16 on v6e/v7x,
        # f32 on v5e).  Result returned in bf16, ready for the next matmul.
        acc = jnp.dot(h_bf16, w, preferred_element_type=jnp.float32)
        act = jnp.maximum(acc.astype(compute_dtype) + b_row, 0)
        return act.astype(jnp.bfloat16)

    h = hidden_layer(x_ref[...].astype(jnp.bfloat16), w1_ref[...],
                     biases[0:1, :])                   # l1[0] + ReLU
    for i in range(NUM_HIDDEN_MM):                     # l1[2], l1[4], l1[6], fc1 (+ReLU)
        h = hidden_layer(h, wh_ref[i], biases[i + 1:i + 2, :])

    # fc_logits: narrow N=2, f32 bias add for output precision.
    logits = jnp.dot(h, w6_ref[...],
                     preferred_element_type=jnp.float32) + b6_ref[...]
    out_ref[...] = logits.astype(out_ref.dtype)


def prepare_params(params, compute_dtype):
    """Pad, stack and cast the f32 [in,out]/[1,out] params for the kernel.

    - w1 padded on K: 4 -> 8 (zero rows match the zero-padded input cols)
    - w2..w5 stacked into one (4,128,128) bf16 array
    - b1..b5 stacked into one (5,128) array in the elementwise compute dtype
    - w6 stays narrow (128,2) bf16; b6 stays (1,2) f32
    """
    (w1, b1), (w2, b2), (w3, b3), (w4, b4), (w5, b5), (w6, b6) = params
    w1p = jnp.pad(w1, ((0, IN_PAD - IN_FEATURES), (0, 0))).astype(jnp.bfloat16)
    wh = jnp.stack([w2, w3, w4, w5], axis=0).astype(jnp.bfloat16)
    bh = jnp.concatenate([b1, b2, b3, b4, b5], axis=0).astype(compute_dtype)
    w6b = w6.astype(jnp.bfloat16)
    b6f = b6.astype(jnp.float32)
    return w1p, wh, bh, w6b, b6f


def actor_forward(x, params, *, batch_tile=2048):
    """x: [..., 4] -> logits [B, 2] with B = prod(leading dims)."""
    x = jnp.asarray(x, jnp.float32).reshape(-1, IN_FEATURES)
    B = x.shape[0]

    compute_dtype = _elementwise_dtype()
    num_cores = _num_tensorcores()
    tile = _choose_tile(B, batch_tile, num_cores)

    Bp = _round_up(B, tile)
    x = jnp.pad(x, ((0, Bp - B), (0, IN_PAD - IN_FEATURES)))

    w1p, wh, bh, w6b, b6f = prepare_params(params, compute_dtype)

    grid = (Bp // tile,)

    def resident_spec(shape):
        # Constant index_map -> block never changes -> stays resident in VMEM.
        ndim = len(shape)
        return pl.BlockSpec(shape, lambda i, _n=ndim: (0,) * _n)

    in_specs = [
        pl.BlockSpec((tile, IN_PAD), lambda i: (i, 0)),   # batch tile of obs
        resident_spec(w1p.shape),
        resident_spec(wh.shape),
        resident_spec(bh.shape),
        resident_spec(w6b.shape),
        resident_spec(b6f.shape),
    ]
    # Narrow output block: last dim (2) equals the full array dim, so the
    # (8,128) divisibility rule is satisfied; writeback is 64x smaller than a
    # 128-lane padded output and no wrapper lane-slice is needed.
    out_spec = pl.BlockSpec((tile, OUT_FEATURES), lambda i: (i, 0))

    flops = 2 * Bp * (IN_PAD * HIDDEN
                      + NUM_HIDDEN_MM * HIDDEN * HIDDEN
                      + HIDDEN * OUT_FEATURES)
    bytes_accessed = (x.size * 4 + Bp * OUT_FEATURES * 4
                      + w1p.size * 2 + wh.size * 2
                      + bh.size * jnp.dtype(compute_dtype).itemsize
                      + w6b.size * 2 + b6f.size * 4)
    cost = pl.CostEstimate(flops=flops, transcendentals=0,
                           bytes_accessed=bytes_accessed)

    kernel = functools.partial(actor_kernel, compute_dtype=compute_dtype)

    out = pl.pallas_call(
        kernel,
        out_shape=jax.ShapeDtypeStruct((Bp, OUT_FEATURES), jnp.float32),
        grid_spec=pltpu.PrefetchScalarGridSpec(
            num_scalar_prefetch=0,
            grid=grid,
            in_specs=in_specs,
            out_specs=out_spec,
        ),
        compiler_params=pltpu.CompilerParams(
            dimension_semantics=("parallel",)),   # megacore-shard batch tiles (v7x)
        cost_estimate=cost,
    )(x, w1p, wh, bh, w6b, b6f)

    return out[:B]


def init_params(key):
    """Deterministic Kaiming-normal weights (fan_in, like nn.init.kaiming_normal_),
    zero biases. Weights stored as [in, out] (transposed vs. PyTorch)."""
    dims = [(IN_FEATURES, HIDDEN),
            (HIDDEN, HIDDEN),
            (HIDDEN, HIDDEN),
            (HIDDEN, HIDDEN),
            (HIDDEN, HIDDEN),
            (HIDDEN, OUT_FEATURES)]
    params = []
    for (fan_in, fan_out) in dims:
        key, sub = jax.random.split(key)
        std = (2.0 / fan_in) ** 0.5
        w = std * jax.random.normal(sub, (fan_in, fan_out), dtype=jnp.float32)
        b = jnp.zeros((1, fan_out), dtype=jnp.float32)
        params.append((w, b))
    return params


def reference_forward(x, params, compute_dtype=None):
    """Plain-JAX reference mirroring the kernel math exactly
    (bf16 matmuls, f32 accumulation, generation-dependent elementwise dtype)."""
    if compute_dtype is None:
        compute_dtype = _elementwise_dtype()
    h = jnp.asarray(x, jnp.float32).reshape(-1, IN_FEATURES)
    n = len(params)
    for i, (w, b) in enumerate(params):
        acc = jnp.dot(h.astype(jnp.bfloat16), w.astype(jnp.bfloat16),
                      preferred_element_type=jnp.float32)
        if i < n - 1:
            h = jnp.maximum(acc.astype(compute_dtype) + b.astype(compute_dtype), 0)
        else:
            h = acc + b.astype(jnp.float32)
    return h.astype(jnp.float32)


if __name__ == "__main__":
    key = jax.random.PRNGKey(0)
    pkey, xkey1, xkey2 = jax.random.split(key, 3)
    params = init_params(pkey)

    # Small, non-multiple-of-8 batch of observations (in_features=4, e.g.
    # CartPole obs): exercises row padding and the small-tile clamp.
    x_small = jax.random.normal(xkey1, (5, IN_FEATURES), dtype=jnp.float32)
    logits_small = jax.block_until_ready(actor_forward(x_small, params))
    ref_small = reference_forward(x_small, params)
    assert logits_small.shape == (5, OUT_FEATURES), logits_small.shape
    assert jnp.allclose(logits_small, ref_small, atol=2e-2, rtol=2e-2), \
        "small-batch mismatch vs reference"

    # A bigger batch that is not a multiple of the tile: exercises the
    # large-tile path, batch padding and (on v7x) a >=2-step parallel grid.
    x_big = jax.random.normal(xkey2, (1040, IN_FEATURES), dtype=jnp.float32)
    logits_big = jax.block_until_ready(actor_forward(x_big, params))
    ref_big = reference_forward(x_big, params)
    assert logits_big.shape == (1040, OUT_FEATURES), logits_big.shape
    assert jnp.allclose(logits_big, ref_big, atol=2e-2, rtol=2e-2), \
        "large-batch mismatch vs reference"

    print("KERNEL_OK")
</pallas_src>

<mosaic_0001>
module attributes {stable_mosaic.version = 11 : i64} {
  func.func @actor_kernel(%arg0: i32, %arg1: memref<8x8xf32, #tpu.memory_space<vmem>>, %arg2: memref<8x128xbf16, #tpu.memory_space<vmem>>, %arg3: memref<4x128x128xbf16, #tpu.memory_space<vmem>>, %arg4: memref<5x128xf32, #tpu.memory_space<vmem>>, %arg5: memref<128x2xbf16, #tpu.memory_space<vmem>>, %arg6: memref<1x2xf32, #tpu.memory_space<vmem>>, %arg7: memref<8x2xf32, #tpu.memory_space<vmem>>) attributes {dimension_semantics = [#tpu.dimension_semantics<parallel>], iteration_bounds = array<i64: 1>, scalar_prefetch = 0 : i64, scratch_operands = 0 : i64, tpu.core_type = #tpu.core_type<tc>, window_params = [{transform_indices = @transform_0, window_bounds = array<i64: 8, 8>}, {pipeline_mode = #tpu.pipeline_mode<synchronous>, transform_indices = @transform_1, window_bounds = array<i64: 8, 128>}, {pipeline_mode = #tpu.pipeline_mode<synchronous>, transform_indices = @transform_2, window_bounds = array<i64: 4, 128, 128>}, {pipeline_mode = #tpu.pipeline_mode<synchronous>, transform_indices = @transform_3, window_bounds = array<i64: 5, 128>}, {pipeline_mode = #tpu.pipeline_mode<synchronous>, transform_indices = @transform_4, window_bounds = array<i64: 128, 2>}, {pipeline_mode = #tpu.pipeline_mode<synchronous>, transform_indices = @transform_5, window_bounds = array<i64: 1, 2>}, {transform_indices = @transform_6, window_bounds = array<i64: 8, 2>}]} {
    %c0 = arith.constant 0 : index
    %c0_0 = arith.constant 0 : index
    %0 = vector.load %arg4[%c0, %c0_0] : memref<5x128xf32, #tpu.memory_space<vmem>>, vector<5x128xf32>
    %c0_1 = arith.constant 0 : index
    %c0_2 = arith.constant 0 : index
    %1 = vector.load %arg1[%c0_1, %c0_2] : memref<8x8xf32, #tpu.memory_space<vmem>>, vector<8x8xf32>
    %2 = arith.truncf %1 : vector<8x8xf32> to vector<8x8xbf16>
    %c0_3 = arith.constant 0 : index
    %c0_4 = arith.constant 0 : index
    %3 = vector.load %arg2[%c0_3, %c0_4] : memref<8x128xbf16, #tpu.memory_space<vmem>>, vector<8x128xbf16>
    %4 = vector.extract_strided_slice %0 {offsets = [0, 0], sizes = [1, 128], strides = [1, 1]} : vector<5x128xf32> to vector<1x128xf32>
    %cst = arith.constant dense<0.000000e+00> : vector<8x128xf32>
    %5 = tpu.matmul %2, %3, %cst {dimension_numbers = #tpu.dot_dimension_numbers<[1], [0], [0], [1], [0, 0, 1, 1], [], []>} : vector<8x8xbf16>, vector<8x128xbf16>, vector<8x128xf32> -> vector<8x128xf32>
    %6 = vector.broadcast %4 : vector<1x128xf32> to vector<8x128xf32>
    %7 = arith.addf %5, %6 : vector<8x128xf32>
    %cst_5 = arith.constant 0.000000e+00 : f32
    %8 = vector.broadcast %cst_5 : f32 to vector<8x128xf32>
    %9 = arith.maximumf %7, %8 : vector<8x128xf32>
    %10 = arith.truncf %9 : vector<8x128xf32> to vector<8x128xbf16>
    %c0_6 = arith.constant 0 : index
    %c0_7 = arith.constant 0 : index
    %c0_8 = arith.constant 0 : index
    %11 = vector.load %arg3[%c0_6, %c0_7, %c0_8] : memref<4x128x128xbf16, #tpu.memory_space<vmem>>, vector<1x128x128xbf16>
    %12 = vector.shape_cast %11 : vector<1x128x128xbf16> to vector<128x128xbf16>
    %13 = vector.extract_strided_slice %0 {offsets = [1, 0], sizes = [1, 128], strides = [1, 1]} : vector<5x128xf32> to vector<1x128xf32>
    %cst_9 = arith.constant dense<0.000000e+00> : vector<8x128xf32>
    %14 = tpu.matmul %10, %12, %cst_9 {dimension_numbers = #tpu.dot_dimension_numbers<[1], [0], [0], [1], [0, 0, 1, 1], [], []>} : vector<8x128xbf16>, vector<128x128xbf16>, vector<8x128xf32> -> vector<8x128xf32>
    %15 = vector.broadcast %13 : vector<1x128xf32> to vector<8x128xf32>
    %16 = arith.addf %14, %15 : vector<8x128xf32>
    %cst_10 = arith.constant 0.000000e+00 : f32
    %17 = vector.broadcast %cst_10 : f32 to vector<8x128xf32>
    %18 = arith.maximumf %16, %17 : vector<8x128xf32>
    %19 = arith.truncf %18 : vector<8x128xf32> to vector<8x128xbf16>
    %c1 = arith.constant 1 : index
    %c0_11 = arith.constant 0 : index
    %c0_12 = arith.constant 0 : index
    %20 = vector.load %arg3[%c1, %c0_11, %c0_12] : memref<4x128x128xbf16, #tpu.memory_space<vmem>>, vector<1x128x128xbf16>
    %21 = vector.shape_cast %20 : vector<1x128x128xbf16> to vector<128x128xbf16>
    %22 = vector.extract_strided_slice %0 {offsets = [2, 0], sizes = [1, 128], strides = [1, 1]} : vector<5x128xf32> to vector<1x128xf32>
    %cst_13 = arith.constant dense<0.000000e+00> : vector<8x128xf32>
    %23 = tpu.matmul %19, %21, %cst_13 {dimension_numbers = #tpu.dot_dimension_numbers<[1], [0], [0], [1], [0, 0, 1, 1], [], []>} : vector<8x128xbf16>, vector<128x128xbf16>, vector<8x128xf32> -> vector<8x128xf32>
    %24 = vector.broadcast %22 : vector<1x128xf32> to vector<8x128xf32>
    %25 = arith.addf %23, %24 : vector<8x128xf32>
    %cst_14 = arith.constant 0.000000e+00 : f32
    %26 = vector.broadcast %cst_14 : f32 to vector<8x128xf32>
    %27 = arith.maximumf %25, %26 : vector<8x128xf32>
    %28 = arith.truncf %27 : vector<8x128xf32> to vector<8x128xbf16>
    %c2 = arith.constant 2 : index
    %c0_15 = arith.constant 0 : index
    %c0_16 = arith.constant 0 : index
    %29 = vector.load %arg3[%c2, %c0_15, %c0_16] : memref<4x128x128xbf16, #tpu.memory_space<vmem>>, vector<1x128x128xbf16>
    %30 = vector.shape_cast %29 : vector<1x128x128xbf16> to vector<128x128xbf16>
    %31 = vector.extract_strided_slice %0 {offsets = [3, 0], sizes = [1, 128], strides = [1, 1]} : vector<5x128xf32> to vector<1x128xf32>
    %cst_17 = arith.constant dense<0.000000e+00> : vector<8x128xf32>
    %32 = tpu.matmul %28, %30, %cst_17 {dimension_numbers = #tpu.dot_dimension_numbers<[1], [0], [0], [1], [0, 0, 1, 1], [], []>} : vector<8x128xbf16>, vector<128x128xbf16>, vector<8x128xf32> -> vector<8x128xf32>
    %33 = vector.broadcast %31 : vector<1x128xf32> to vector<8x128xf32>
    %34 = arith.addf %32, %33 : vector<8x128xf32>
    %cst_18 = arith.constant 0.000000e+00 : f32
    %35 = vector.broadcast %cst_18 : f32 to vector<8x128xf32>
    %36 = arith.maximumf %34, %35 : vector<8x128xf32>
    %37 = arith.truncf %36 : vector<8x128xf32> to vector<8x128xbf16>
    %c3 = arith.constant 3 : index
    %c0_19 = arith.constant 0 : index
    %c0_20 = arith.constant 0 : index
    %38 = vector.load %arg3[%c3, %c0_19, %c0_20] : memref<4x128x128xbf16, #tpu.memory_space<vmem>>, vector<1x128x128xbf16>
    %39 = vector.shape_cast %38 : vector<1x128x128xbf16> to vector<128x128xbf16>
    %40 = vector.extract_strided_slice %0 {offsets = [4, 0], sizes = [1, 128], strides = [1, 1]} : vector<5x128xf32> to vector<1x128xf32>
    %cst_21 = arith.constant dense<0.000000e+00> : vector<8x128xf32>
    %41 = tpu.matmul %37, %39, %cst_21 {dimension_numbers = #tpu.dot_dimension_numbers<[1], [0], [0], [1], [0, 0, 1, 1], [], []>} : vector<8x128xbf16>, vector<128x128xbf16>, vector<8x128xf32> -> vector<8x128xf32>
    %42 = vector.broadcast %40 : vector<1x128xf32> to vector<8x128xf32>
    %43 = arith.addf %41, %42 : vector<8x128xf32>
    %cst_22 = arith.constant 0.000000e+00 : f32
    %44 = vector.broadcast %cst_22 : f32 to vector<8x128xf32>
    %45 = arith.maximumf %43, %44 : vector<8x128xf32>
    %46 = arith.truncf %45 : vector<8x128xf32> to vector<8x128xbf16>
    %c0_23 = arith.constant 0 : index
    %c0_24 = arith.constant 0 : index
    %47 = vector.load %arg5[%c0_23, %c0_24] : memref<128x2xbf16, #tpu.memory_space<vmem>>, vector<128x2xbf16>
    %cst_25 = arith.constant dense<0.000000e+00> : vector<8x2xf32>
    %48 = tpu.matmul %46, %47, %cst_25 {dimension_numbers = #tpu.dot_dimension_numbers<[1], [0], [0], [1], [0, 0, 1, 1], [], []>} : vector<8x128xbf16>, vector<128x2xbf16>, vector<8x2xf32> -> vector<8x2xf32>
    %c0_26 = arith.constant 0 : index
    %c0_27 = arith.constant 0 : index
    %49 = vector.load %arg6[%c0_26, %c0_27] : memref<1x2xf32, #tpu.memory_space<vmem>>, vector<1x2xf32>
    %50 = vector.broadcast %49 : vector<1x2xf32> to vector<8x2xf32>
    %51 = arith.addf %48, %50 : vector<8x2xf32>
    %c0_28 = arith.constant 0 : index
    %c0_29 = arith.constant 0 : index
    %52 = vector.load %arg7[%c0_28, %c0_29] : memref<8x2xf32, #tpu.memory_space<vmem>>, vector<8x2xf32>
    tpu.vector_store %arg7[%c0_28, %c0_29], %51 {strides = array<i32>} : memref<8x2xf32, #tpu.memory_space<vmem>>, vector<8x2xf32>,
    return
  }
  func.func @transform_0(%arg0: i32) -> (i32, i32) {
    %c0_i32 = arith.constant 0 : i32
    %c0_i32_0 = arith.constant 0 : i32
    return %arg0, %c0_i32 : i32, i32
  }
  func.func @transform_1(%arg0: i32) -> (i32, i32) {
    %c0_i32 = arith.constant 0 : i32
    %c0_i32_0 = arith.constant 0 : i32
    %c0_i32_1 = arith.constant 0 : i32
    return %c0_i32, %c0_i32_0 : i32, i32
  }
  func.func @transform_2(%arg0: i32) -> (i32, i32, i32) {
    %c0_i32 = arith.constant 0 : i32
    %c0_i32_0 = arith.constant 0 : i32
    %c0_i32_1 = arith.constant 0 : i32
    %c0_i32_2 = arith.constant 0 : i32
    return %c0_i32, %c0_i32_0, %c0_i32_1 : i32, i32, i32
  }
  func.func @transform_3(%arg0: i32) -> (i32, i32) {
    %c0_i32 = arith.constant 0 : i32
    %c0_i32_0 = arith.constant 0 : i32
    %c0_i32_1 = arith.constant 0 : i32
    return %c0_i32, %c0_i32_0 : i32, i32
  }
  func.func @transform_4(%arg0: i32) -> (i32, i32) {
    %c0_i32 = arith.constant 0 : i32
    %c0_i32_0 = arith.constant 0 : i32
    %c0_i32_1 = arith.constant 0 : i32
    return %c0_i32, %c0_i32_0 : i32, i32
  }
  func.func @transform_5(%arg0: i32) -> (i32, i32) {
    %c0_i32 = arith.constant 0 : i32
    %c0_i32_0 = arith.constant 0 : i32
    %c0_i32_1 = arith.constant 0 : i32
    return %c0_i32, %c0_i32_0 : i32, i32
  }
  func.func @transform_6(%arg0: i32) -> (i32, i32) {
    %c0_i32 = arith.constant 0 : i32
    %c0_i32_0 = arith.constant 0 : i32
    return %arg0, %c0_i32 : i32, i32
  }
}

</mosaic_0001>

<llo_original>
// kernel: tpu_custom_call.1
$region0: #{tpu_custom_call.1}
  #allocation0 [shape = 'u32[]', space=smem, size = 0x4, offset = 0x4, fixed_abs, tag = 'smem constant byte address 0x4 - core index']
  #allocation1 [shape = 'u32[144,128]{1,0:T(1,128)}', space=vmem, size = 0x12000, scoped, tag = 'internal scratch']
  %s0 = inlined_call_operand.vmem [shape: f32[8,8], index: 0, kind: input, shape index: {}]
  %s1 = inlined_call_operand.vmem [shape: bf16[8,128], index: 1, kind: input, shape index: {}]
  %s2 = inlined_call_operand.hbm [shape: bf16[4,128,128], index: 2, kind: input, shape index: {}]
  %s3 = inlined_call_operand.vmem [shape: f32[5,128], index: 3, kind: input, shape index: {}]
  %s4 = inlined_call_operand.vmem [shape: bf16[128,2], index: 4, kind: input, shape index: {}]
  %s5 = inlined_call_operand.vmem [shape: f32[1,2], index: 5, kind: input, shape index: {}]
  %s6 = inlined_call_operand.vmem [shape: f32[8,2], index: 6, kind: output, shape index: {}]
  %s7 = sld [smem:[#allocation0]]
  $region38: #{tpu_custom_call.1} parent=0
    _
  %s9 = ssub.s32 1, %s7
  %s10 = scalar_select 0, %s9, %s7
  $region1: #{tpu_custom_call.1} parent=0
    #allocation2 [shape = 'u8[131072]{0}', space=vmem, size = 0x20000, scoped, tag = 'input window, operand 2, single buffered']
    #allocation3 [shape = 's32[1]{0}', space=sflag, size = 0x4, scoped, tag = 'scoped memory for tpu_custom_call.1']
    %11 = vsyncpa [#allocation3], 0
    // Predicated region
    $region2: #{tpu_custom_call.1} parent=1 // pred_check
      _
    $region3: #{tpu_custom_call.1} parent=1 // pred_check_branch
      %13 = sbr.rel (0) target = $region5
    $region4: #{tpu_custom_call.1} parent=1 // pred_region
      _
    $region5: #{tpu_custom_call.1} parent=1 // pred_fallthru
      _
    // Predicated region
    $region6: #{tpu_custom_call.1} parent=1 // pred_check
      _
    $region7: #{tpu_custom_call.1} parent=1 // pred_check_branch
      %15 = sbr.rel (0) target = $region9
    $region8: #{tpu_custom_call.1} parent=1 // pred_region
      _
    $region9: #{tpu_custom_call.1} parent=1 // pred_fallthru
      _
    // Predicated region
    $region10: #{tpu_custom_call.1} parent=1 // pred_check
      _
    $region11: #{tpu_custom_call.1} parent=1 // pred_check_branch
      %17 = sbr.rel (0) target = $region13
    $region12: #{tpu_custom_call.1} parent=1 // pred_region
      %s19 = ssub.s32 4096, 4096
      %20 = vsyncadd [#allocation3], %s19
      %s21 = sshll.u32 [#allocation2], 4
      %s22 = int_to_ptr.vmem [resolvable:$true] %s21
      %27 = dma.hbm_to_vmem [thread:$0]  %s2, 4096, %s22, [#allocation3], 64, 64, 4
    $region13: #{tpu_custom_call.1} parent=1 // pred_fallthru
      _
    // Predicated region
    $region14: #{tpu_custom_call.1} parent=1 // pred_check
      _
    $region15: #{tpu_custom_call.1} parent=1 // pred_check_branch
      %29 = sbr.rel (0) target = $region17
    $region16: #{tpu_custom_call.1} parent=1 // pred_region
      _
    $region17: #{tpu_custom_call.1} parent=1 // pred_fallthru
      _
    // Predicated region
    $region18: #{tpu_custom_call.1} parent=1 // pred_check
      _
    $region19: #{tpu_custom_call.1} parent=1 // pred_check_branch
      %31 = sbr.rel (0) target = $region21
    $region20: #{tpu_custom_call.1} parent=1 // pred_region
      _
    $region21: #{tpu_custom_call.1} parent=1 // pred_fallthru
      _
    // Predicated region
    $region22: #{tpu_custom_call.1} parent=1 // pred_check
      _
    $region23: #{tpu_custom_call.1} parent=1 // pred_check_branch
      %33 = sbr.rel (0) target = $region25
    $region24: #{tpu_custom_call.1} parent=1 // pred_region
      _
    $region25: #{tpu_custom_call.1} parent=1 // pred_fallthru
      _
    // Predicated region
    $region26: #{tpu_custom_call.1} parent=1 // pred_check
      _
    $region27: #{tpu_custom_call.1} parent=1 // pred_check_branch
      %35 = sbr.rel (0) target = $region29
    $region28: #{tpu_custom_call.1} parent=1 // pred_region
      %36 = dma.done [#allocation3], 4096
    $region29: #{tpu_custom_call.1} parent=1 // pred_fallthru
      _
    %v38 = vld [vmem:[%s3] sm:$0x1f]
    %v39 = vld [vmem:[%s0] sm:$0xff]
    %v40 = vpack.c.bf16 %v39, %v39
    %v41 = vld [vmem:[%s1] sm:$0xf]
    %v42 = vlaneseq
    %v43 = vshrl.u32 %v42, 7
    %v44 = vsub.s32 0, %v43
    %v45 = vrot.slane %v38, %v44
    %vm46 = vcmask 64512
    %v48 = vsel %vm46, %v40, 0
    %vm50 = vcmask 1043456
    %v52 = vsel %vm50, %v41, 0
    %54 = vmatprep.subr.bf16.mxu0 0
    %55 = vmatpush1.bf16.msra.mxu0 %v52
    %56 = vmatprep.subr.bf16.mxu0 0
    %57 = vmatpush1.bf16.msra.mxu0 0
    %58 = vmatprep.subr.bf16.mxu0 0
    %59 = vmatpush1.bf16.msra.mxu0 0
    %60 = vmatprep.subr.bf16.mxu0 0
    %61 = vmatpush1.bf16.msra.mxu0 0
    %62 = vmatprep.subr.bf16.mxu0 0
    %63 = vmatpush1.bf16.msra.mxu0 0
    %64 = vmatprep.subr.bf16.mxu0 0
    %65 = vmatpush1.bf16.msra.mxu0 0
    %66 = vmatprep.subr.bf16.mxu0 0
    %67 = vmatpush1.bf16.msra.mxu0 0
    %68 = vmatprep.subr.bf16.mxu0 0
    %69 = vmatpush1.bf16.msra.mxu0 0
    %70 = vmatprep.subr.bf16.mxu0 0
    %71 = vmatpush1.bf16.msra.mxu0 0
    %72 = vmatprep.subr.bf16.mxu0 0
    %73 = vmatpush1.bf16.msra.mxu0 0
    %74 = vmatprep.subr.bf16.mxu0 0
    %75 = vmatpush1.bf16.msra.mxu0 0
    %76 = vmatprep.subr.bf16.mxu0 0
    %77 = vmatpush1.bf16.msra.mxu0 0
    %78 = vmatprep.subr.bf16.mxu0 0
    %79 = vmatpush1.bf16.msra.mxu0 0
    %80 = vmatprep.subr.bf16.mxu0 0
    %81 = vmatpush1.bf16.msra.mxu0 0
    %82 = vmatprep.subr.bf16.mxu0 0
    %83 = vmatpush1.bf16.msra.mxu0 0
    %84 = vmatprep.subr.bf16.mxu0 0
    %85 = vmatpush1.bf16.msra.mxu0 0
    %86 = vmatprep.mubr.bf16.mxu0 0
    %87 = vmatmul.mubr.bf16.gmra.mrb[0].mxu0 %v48
    %v88 = vpop.f32.mrb[0].mxu0
    %v89 = vadd.f32 %v45, %v88
    %v90 = vpop.f32.mrb[0].mxu0
    %v91 = vpop.f32.mrb[0].mxu0
    %v92 = vpop.f32.mrb[0].mxu0
    %93 = vdwg.mxu0
    %v94 = vmax.f32 %v89, 0.0
    %v95 = vpack.c.bf16 %v94, %v94
    %v96 = vld [vmem:[#allocation2] sm:$0xf]
    %v97 = vld [vmem:[#allocation2 + $0x4] sm:$0xf]
    %v98 = vld [vmem:[#allocation2 + $0x8] sm:$0xf]
    %v99 = vld [vmem:[#allocation2 + $0xc] sm:$0xf]
    %v100 = vld [vmem:[#allocation2 + $0x10] sm:$0xf]
    %v101 = vld [vmem:[#allocation2 + $0x14] sm:$0xf]
    %v102 = vld [vmem:[#allocation2 + $0x18] sm:$0xf]
    %v103 = vld [vmem:[#allocation2 + $0x1c] sm:$0xf]
    %v104 = vld [vmem:[#allocation2 + $0x20] sm:$0xf]
    %v105 = vld [vmem:[#allocation2 + $0x24] sm:$0xf]
    %v106 = vld [vmem:[#allocation2 + $0x28] sm:$0xf]
    %v107 = vld [vmem:[#allocation2 + $0x2c] sm:$0xf]
    %v108 = vld [vmem:[#allocation2 + $0x30] sm:$0xf]
    %v109 = vld [vmem:[#allocation2 + $0x34] sm:$0xf]
    %v110 = vld [vmem:[#allocation2 + $0x38] sm:$0xf]
    %v111 = vld [vmem:[#allocation2 + $0x3c] sm:$0xf]
    %v112 = vlaneseq
    %v113 = vshrl.u32 %v112, 7
    %v114 = vsub.s32 1, %v113
    %v115 = vrot.slane %v38, %v114
    %v132 = vunpack.c.l.b16 %v96
    %v133 = vunpack.c.l.b16 %v97
    %v134 = vunpack.c.l.b16 %v98
    %v135 = vunpack.c.l.b16 %v99
    %v136 = vunpack.c.l.b16 %v100
    %v137 = vunpack.c.l.b16 %v101
    %v138 = vunpack.c.l.b16 %v102
    %v139 = vunpack.c.l.b16 %v103
    %v140 = vunpack.c.l.b16 %v104
    %v141 = vunpack.c.l.b16 %v105
    %v142 = vunpack.c.l.b16 %v106
    %v143 = vunpack.c.l.b16 %v107
    %v144 = vunpack.c.l.b16 %v108
    %v145 = vunpack.c.l.b16 %v109
    %v146 = vunpack.c.l.b16 %v110
    %v147 = vunpack.c.l.b16 %v111
    %v148 = vpack.c.b16 %v133, %v132
    %v149 = vpack.c.b16 %v135, %v134
    %v150 = vpack.c.b16 %v137, %v136
    %v151 = vpack.c.b16 %v139, %v138
    %v152 = vpack.c.b16 %v141, %v140
    %v153 = vpack.c.b16 %v143, %v142
    %v154 = vpack.c.b16 %v145, %v144
    %v155 = vpack.c.b16 %v147, %v146
    %164 = vmatprep.subr.bf16.mxu0 0
    %165 = vmatpush1.bf16.msra.mxu0 %v148
    %166 = vmatprep.subr.bf16.mxu0 0
    %167 = vmatpush1.bf16.msra.mxu0 %v149
    %168 = vmatprep.subr.bf16.mxu0 0
    %169 = vmatpush1.bf16.msra.mxu0 %v150
    %170 = vmatprep.subr.bf16.mxu0 0
    %171 = vmatpush1.bf16.msra.mxu0 %v151
    %172 = vmatprep.subr.bf16.mxu0 0
    %173 = vmatpush1.bf16.msra.mxu0 %v152
    %174 = vmatprep.subr.bf16.mxu0 0
    %175 = vmatpush1.bf16.msra.mxu0 %v153
    %176 = vmatprep.subr.bf16.mxu0 0
    %177 = vmatpush1.bf16.msra.mxu0 %v154
    %178 = vmatprep.subr.bf16.mxu0 0
    %179 = vmatpush1.bf16.msra.mxu0 %v155
    %180 = vmatprep.subr.bf16.mxu0 0
    %181 = vmatpush1.bf16.msra.mxu0 0
    %182 = vmatprep.subr.bf16.mxu0 0
    %183 = vmatpush1.bf16.msra.mxu0 0
    %184 = vmatprep.subr.bf16.mxu0 0
    %185 = vmatpush1.bf16.msra.mxu0 0
    %186 = vmatprep.subr.bf16.mxu0 0
    %187 = vmatpush1.bf16.msra.mxu0 0
    %188 = vmatprep.subr.bf16.mxu0 0
    %189 = vmatpush1.bf16.msra.mxu0 0
    %190 = vmatprep.subr.bf16.mxu0 0
    %191 = vmatpush1.bf16.msra.mxu0 0
    %192 = vmatprep.subr.bf16.mxu0 0
    %193 = vmatpush1.bf16.msra.mxu0 0
    %194 = vmatprep.subr.bf16.mxu0 0
    %195 = vmatpush1.bf16.msra.mxu0 0
    %196 = vmatprep.mubr.bf16.mxu0 0
    %197 = vmatmul.mubr.bf16.gmra.mrb[0].mxu0 %v95
    %v198 = vpop.f32.mrb[0].mxu0
    %v199 = vadd.f32 %v115, %v198
    %v200 = vpop.f32.mrb[0].mxu0
    %v201 = vpop.f32.mrb[0].mxu0
    %v202 = vpop.f32.mrb[0].mxu0
    %203 = vdwg.mxu0
    %v204 = vmax.f32 %v199, 0.0
    %v205 = vpack.c.bf16 %v204, %v204
    %s206 = scalar_lea.vmem [#allocation2], 64
    %v207 = vld [vmem:[%s206] sm:$0xf]
    %v208 = vld [vmem:[%s206 + $0x4] sm:$0xf]
    %v209 = vld [vmem:[%s206 + $0x8] sm:$0xf]
    %v210 = vld [vmem:[%s206 + $0xc] sm:$0xf]
    %v211 = vld [vmem:[%s206 + $0x10] sm:$0xf]
    %v212 = vld [vmem:[%s206 + $0x14] sm:$0xf]
    %v213 = vld [vmem:[%s206 + $0x18] sm:$0xf]
    %v214 = vld [vmem:[%s206 + $0x1c] sm:$0xf]
    %v215 = vld [vmem:[%s206 + $0x20] sm:$0xf]
    %v216 = vld [vmem:[%s206 + $0x24] sm:$0xf]
    %v217 = vld [vmem:[%s206 + $0x28] sm:$0xf]
    %v218 = vld [vmem:[%s206 + $0x2c] sm:$0xf]
    %v219 = vld [vmem:[%s206 + $0x30] sm:$0xf]
    %v220 = vld [vmem:[%s206 + $0x34] sm:$0xf]
    %v221 = vld [vmem:[%s206 + $0x38] sm:$0xf]
    %v222 = vld [vmem:[%s206 + $0x3c] sm:$0xf]
    %v223 = vlaneseq
    %v224 = vshrl.u32 %v223, 7
    %v225 = vsub.s32 2, %v224
    %v226 = vrot.slane %v38, %v225
    %v243 = vunpack.c.l.b16 %v207
    %v244 = vunpack.c.l.b16 %v208
    %v245 = vunpack.c.l.b16 %v209
    %v246 = vunpack.c.l.b16 %v210
    %v247 = vunpack.c.l.b16 %v211
    %v248 = vunpack.c.l.b16 %v212
    %v249 = vunpack.c.l.b16 %v213
    %v250 = vunpack.c.l.b16 %v214
    %v251 = vunpack.c.l.b16 %v215
    %v252 = vunpack.c.l.b16 %v216
    %v253 = vunpack.c.l.b16 %v217
    %v254 = vunpack.c.l.b16 %v218
    %v255 = vunpack.c.l.b16 %v219
    %v256 = vunpack.c.l.b16 %v220
    %v257 = vunpack.c.l.b16 %v221
    %v258 = vunpack.c.l.b16 %v222
    %v259 = vpack.c.b16 %v244, %v243
    %v260 = vpack.c.b16 %v246, %v245
    %v261 = vpack.c.b16 %v248, %v247
    %v262 = vpack.c.b16 %v250, %v249
    %v263 = vpack.c.b16 %v252, %v251
    %v264 = vpack.c.b16 %v254, %v253
    %v265 = vpack.c.b16 %v256, %v255
    %v266 = vpack.c.b16 %v258, %v257
    %275 = vmatprep.subr.bf16.mxu0 0
    %276 = vmatpush1.bf16.msra.mxu0 %v259
    %277 = vmatprep.subr.bf16.mxu0 0
    %278 = vmatpush1.bf16.msra.mxu0 %v260
    %279 = vmatprep.subr.bf16.mxu0 0
    %280 = vmatpush1.bf16.msra.mxu0 %v261
    %281 = vmatprep.subr.bf16.mxu0 0
    %282 = vmatpush1.bf16.msra.mxu0 %v262
    %283 = vmatprep.subr.bf16.mxu0 0
    %284 = vmatpush1.bf16.msra.mxu0 %v263
    %285 = vmatprep.subr.bf16.mxu0 0
    %286 = vmatpush1.bf16.msra.mxu0 %v264
    %287 = vmatprep.subr.bf16.mxu0 0
    %288 = vmatpush1.bf16.msra.mxu0 %v265
    %289 = vmatprep.subr.bf16.mxu0 0
    %290 = vmatpush1.bf16.msra.mxu0 %v266
    %291 = vmatprep.subr.bf16.mxu0 0
    %292 = vmatpush1.bf16.msra.mxu0 0
    %293 = vmatprep.subr.bf16.mxu0 0
    %294 = vmatpush1.bf16.msra.mxu0 0
    %295 = vmatprep.subr.bf16.mxu0 0
    %296 = vmatpush1.bf16.msra.mxu0 0
    %297 = vmatprep.subr.bf16.mxu0 0
    %298 = vmatpush1.bf16.msra.mxu0 0
    %299 = vmatprep.subr.bf16.mxu0 0
    %300 = vmatpush1.bf16.msra.mxu0 0
    %301 = vmatprep.subr.bf16.mxu0 0
    %302 = vmatpush1.bf16.msra.mxu0 0
    %303 = vmatprep.subr.bf16.mxu0 0
    %304 = vmatpush1.bf16.msra.mxu0 0
    %305 = vmatprep.subr.bf16.mxu0 0
    %306 = vmatpush1.bf16.msra.mxu0 0
    %307 = vmatprep.mubr.bf16.mxu0 0
    %308 = vmatmul.mubr.bf16.gmra.mrb[0].mxu0 %v205
    %v309 = vpop.f32.mrb[0].mxu0
    %v310 = vadd.f32 %v226, %v309
    %v311 = vpop.f32.mrb[0].mxu0
    %v312 = vpop.f32.mrb[0].mxu0
    %v313 = vpop.f32.mrb[0].mxu0
    %314 = vdwg.mxu0
    %v315 = vmax.f32 %v310, 0.0
    %v316 = vpack.c.bf16 %v315, %v315
    %s317 = scalar_lea.vmem [#allocation2], 128
    %v318 = vld [vmem:[%s317] sm:$0xf]
    %v319 = vld [vmem:[%s317 + $0x4] sm:$0xf]
    %v320 = vld [vmem:[%s317 + $0x8] sm:$0xf]
    %v321 = vld [vmem:[%s317 + $0xc] sm:$0xf]
    %v322 = vld [vmem:[%s317 + $0x10] sm:$0xf]
    %v323 = vld [vmem:[%s317 + $0x14] sm:$0xf]
    %v324 = vld [vmem:[%s317 + $0x18] sm:$0xf]
    %v325 = vld [vmem:[%s317 + $0x1c] sm:$0xf]
    %v326 = vld [vmem:[%s317 + $0x20] sm:$0xf]
    %v327 = vld [vmem:[%s317 + $0x24] sm:$0xf]
    %v328 = vld [vmem:[%s317 + $0x28] sm:$0xf]
    %v329 = vld [vmem:[%s317 + $0x2c] sm:$0xf]
    %v330 = vld [vmem:[%s317 + $0x30] sm:$0xf]
    %v331 = vld [vmem:[%s317 + $0x34] sm:$0xf]
    %v332 = vld [vmem:[%s317 + $0x38] sm:$0xf]
    %v333 = vld [vmem:[%s317 + $0x3c] sm:$0xf]
    %v334 = vlaneseq
    %v335 = vshrl.u32 %v334, 7
    %v336 = vsub.s32 3, %v335
    %v337 = vrot.slane %v38, %v336
    %v354 = vunpack.c.l.b16 %v318
    %v355 = vunpack.c.l.b16 %v319
    %v356 = vunpack.c.l.b16 %v320
    %v357 = vunpack.c.l.b16 %v321
    %v358 = vunpack.c.l.b16 %v322
    %v359 = vunpack.c.l.b16 %v323
    %v360 = vunpack.c.l.b16 %v324
    %v361 = vunpack.c.l.b16 %v325
    %v362 = vunpack.c.l.b16 %v326
    %v363 = vunpack.c.l.b16 %v327
    %v364 = vunpack.c.l.b16 %v328
    %v365 = vunpack.c.l.b16 %v329
    %v366 = vunpack.c.l.b16 %v330
    %v367 = vunpack.c.l.b16 %v331
    %v368 = vunpack.c.l.b16 %v332
    %v369 = vunpack.c.l.b16 %v333
    %v370 = vpack.c.b16 %v355, %v354
    %v371 = vpack.c.b16 %v357, %v356
    %v372 = vpack.c.b16 %v359, %v358
    %v373 = vpack.c.b16 %v361, %v360
    %v374 = vpack.c.b16 %v363, %v362
    %v375 = vpack.c.b16 %v365, %v364
    %v376 = vpack.c.b16 %v367, %v366
    %v377 = vpack.c.b16 %v369, %v368
    %386 = vmatprep.subr.bf16.mxu0 0
    %387 = vmatpush1.bf16.msra.mxu0 %v370
    %388 = vmatprep.subr.bf16.mxu0 0
    %389 = vmatpush1.bf16.msra.mxu0 %v371
    %390 = vmatprep.subr.bf16.mxu0 0
    %391 = vmatpush1.bf16.msra.mxu0 %v372
    %392 = vmatprep.subr.bf16.mxu0 0
    %393 = vmatpush1.bf16.msra.mxu0 %v373
    %394 = vmatprep.subr.bf16.mxu0 0
    %395 = vmatpush1.bf16.msra.mxu0 %v374
    %396 = vmatprep.subr.bf16.mxu0 0
    %397 = vmatpush1.bf16.msra.mxu0 %v375
    %398 = vmatprep.subr.bf16.mxu0 0
    %399 = vmatpush1.bf16.msra.mxu0 %v376
    %400 = vmatprep.subr.bf16.mxu0 0
    %401 = vmatpush1.bf16.msra.mxu0 %v377
    %402 = vmatprep.subr.bf16.mxu0 0
    %403 = vmatpush1.bf16.msra.mxu0 0
    %404 = vmatprep.subr.bf16.mxu0 0
    %405 = vmatpush1.bf16.msra.mxu0 0
    %406 = vmatprep.subr.bf16.mxu0 0
    %407 = vmatpush1.bf16.msra.mxu0 0
    %408 = vmatprep.subr.bf16.mxu0 0
    %409 = vmatpush1.bf16.msra.mxu0 0
    %410 = vmatprep.subr.bf16.mxu0 0
    %411 = vmatpush1.bf16.msra.mxu0 0
    %412 = vmatprep.subr.bf16.mxu0 0
    %413 = vmatpush1.bf16.msra.mxu0 0
    %414 = vmatprep.subr.bf16.mxu0 0
    %415 = vmatpush1.bf16.msra.mxu0 0
    %416 = vmatprep.subr.bf16.mxu0 0
    %417 = vmatpush1.bf16.msra.mxu0 0
    %418 = vmatprep.mubr.bf16.mxu0 0
    %419 = vmatmul.mubr.bf16.gmra.mrb[0].mxu0 %v316
    %v420 = vpop.f32.mrb[0].mxu0
    %v421 = vadd.f32 %v337, %v420
    %v422 = vpop.f32.mrb[0].mxu0
    %v423 = vpop.f32.mrb[0].mxu0
    %v424 = vpop.f32.mrb[0].mxu0
    %425 = vdwg.mxu0
    %v426 = vmax.f32 %v421, 0.0
    %v427 = vpack.c.bf16 %v426, %v426
    %s428 = scalar_lea.vmem [#allocation2], 192
    %v429 = vld [vmem:[%s428] sm:$0xf]
    %v430 = vld [vmem:[%s428 + $0x4] sm:$0xf]
    %v431 = vld [vmem:[%s428 + $0x8] sm:$0xf]
    %v432 = vld [vmem:[%s428 + $0xc] sm:$0xf]
    %v433 = vld [vmem:[%s428 + $0x10] sm:$0xf]
    %v434 = vld [vmem:[%s428 + $0x14] sm:$0xf]
    %v435 = vld [vmem:[%s428 + $0x18] sm:$0xf]
    %v436 = vld [vmem:[%s428 + $0x1c] sm:$0xf]
    %v437 = vld [vmem:[%s428 + $0x20] sm:$0xf]
    %v438 = vld [vmem:[%s428 + $0x24] sm:$0xf]
    %v439 = vld [vmem:[%s428 + $0x28] sm:$0xf]
    %v440 = vld [vmem:[%s428 + $0x2c] sm:$0xf]
    %v441 = vld [vmem:[%s428 + $0x30] sm:$0xf]
    %v442 = vld [vmem:[%s428 + $0x34] sm:$0xf]
    %v443 = vld [vmem:[%s428 + $0x38] sm:$0xf]
    %v444 = vld [vmem:[%s428 + $0x3c] sm:$0xf]
    %v445 = vlaneseq
    %v446 = vshrl.u32 %v445, 7
    %v447 = vsub.s32 4, %v446
    %v448 = vrot.slane %v38, %v447
    %v465 = vunpack.c.l.b16 %v429
    %v466 = vunpack.c.l.b16 %v430
    %v467 = vunpack.c.l.b16 %v431
    %v468 = vunpack.c.l.b16 %v432
    %v469 = vunpack.c.l.b16 %v433
    %v470 = vunpack.c.l.b16 %v434
    %v471 = vunpack.c.l.b16 %v435
    %v472 = vunpack.c.l.b16 %v436
    %v473 = vunpack.c.l.b16 %v437
    %v474 = vunpack.c.l.b16 %v438
    %v475 = vunpack.c.l.b16 %v439
    %v476 = vunpack.c.l.b16 %v440
    %v477 = vunpack.c.l.b16 %v441
    %v478 = vunpack.c.l.b16 %v442
    %v479 = vunpack.c.l.b16 %v443
    %v480 = vunpack.c.l.b16 %v444
    %v481 = vpack.c.b16 %v466, %v465
    %v482 = vpack.c.b16 %v468, %v467
    %v483 = vpack.c.b16 %v470, %v469
    %v484 = vpack.c.b16 %v472, %v471
    %v485 = vpack.c.b16 %v474, %v473
    %v486 = vpack.c.b16 %v476, %v475
    %v487 = vpack.c.b16 %v478, %v477
    %v488 = vpack.c.b16 %v480, %v479
    %497 = vmatprep.subr.bf16.mxu0 0
    %498 = vmatpush1.bf16.msra.mxu0 %v481
    %499 = vmatprep.subr.bf16.mxu0 0
    %500 = vmatpush1.bf16.msra.mxu0 %v482
    %501 = vmatprep.subr.bf16.mxu0 0
    %502 = vmatpush1.bf16.msra.mxu0 %v483
    %503 = vmatprep.subr.bf16.mxu0 0
    %504 = vmatpush1.bf16.msra.mxu0 %v484
    %505 = vmatprep.subr.bf16.mxu0 0
    %506 = vmatpush1.bf16.msra.mxu0 %v485
    %507 = vmatprep.subr.bf16.mxu0 0
    %508 = vmatpush1.bf16.msra.mxu0 %v486
    %509 = vmatprep.subr.bf16.mxu0 0
    %510 = vmatpush1.bf16.msra.mxu0 %v487
    %511 = vmatprep.subr.bf16.mxu0 0
    %512 = vmatpush1.bf16.msra.mxu0 %v488
    %513 = vmatprep.subr.bf16.mxu0 0
    %514 = vmatpush1.bf16.msra.mxu0 0
    %515 = vmatprep.subr.bf16.mxu0 0
    %516 = vmatpush1.bf16.msra.mxu0 0
    %517 = vmatprep.subr.bf16.mxu0 0
    %518 = vmatpush1.bf16.msra.mxu0 0
    %519 = vmatprep.subr.bf16.mxu0 0
    %520 = vmatpush1.bf16.msra.mxu0 0
    %521 = vmatprep.subr.bf16.mxu0 0
    %522 = vmatpush1.bf16.msra.mxu0 0
    %523 = vmatprep.subr.bf16.mxu0 0
    %524 = vmatpush1.bf16.msra.mxu0 0
    %525 = vmatprep.subr.bf16.mxu0 0
    %526 = vmatpush1.bf16.msra.mxu0 0
    %527 = vmatprep.subr.bf16.mxu0 0
    %528 = vmatpush1.bf16.msra.mxu0 0
    %529 = vmatprep.mubr.bf16.mxu0 0
    %530 = vmatmul.mubr.bf16.gmra.mrb[0].mxu0 %v427
    %v531 = vpop.f32.mrb[0].mxu0
    %v532 = vadd.f32 %v448, %v531
    %v533 = vpop.f32.mrb[0].mxu0
    %v534 = vpop.f32.mrb[0].mxu0
    %v535 = vpop.f32.mrb[0].mxu0
    %536 = vdwg.mxu0
    %v537 = vmax.f32 %v532, 0.0
    %v538 = vpack.c.bf16 %v537, %v537
    %v539 = vld [vmem:[%s4] sm:$0xf]
    %v540 = vld [vmem:[%s4 + $0x4] sm:$0xf]
    %v541 = vld [vmem:[%s4 + $0x8] sm:$0xf]
    %v542 = vld [vmem:[%s4 + $0xc] sm:$0xf]
    %v543 = vld [vmem:[%s4 + $0x10] sm:$0xf]
    %v544 = vld [vmem:[%s4 + $0x14] sm:$0xf]
    %v545 = vld [vmem:[%s4 + $0x18] sm:$0xf]
    %v546 = vld [vmem:[%s4 + $0x1c] sm:$0xf]
    %v547 = vld [vmem:[%s4 + $0x20] sm:$0xf]
    %v548 = vld [vmem:[%s4 + $0x24] sm:$0xf]
    %v549 = vld [vmem:[%s4 + $0x28] sm:$0xf]
    %v550 = vld [vmem:[%s4 + $0x2c] sm:$0xf]
    %v551 = vld [vmem:[%s4 + $0x30] sm:$0xf]
    %v552 = vld [vmem:[%s4 + $0x34] sm:$0xf]
    %v553 = vld [vmem:[%s4 + $0x38] sm:$0xf]
    %v554 = vld [vmem:[%s4 + $0x3c] sm:$0xf]
    %v555 = vld [vmem:[%s5] sm:$0x1]
    %v557 = vlaneseq
    %v558 = vshrl.u32 %v557, 7
    %v559 = vsub.s32 0, %v558
    %v560 = vrot.slane %v555, %v559
    %v578 = vunpack.c.l.b16 %v539
    %v579 = vunpack.c.l.b16 %v540
    %v580 = vunpack.c.l.b16 %v541
    %v581 = vunpack.c.l.b16 %v542
    %v582 = vunpack.c.l.b16 %v543
    %v583 = vunpack.c.l.b16 %v544
    %v584 = vunpack.c.l.b16 %v545
    %v585 = vunpack.c.l.b16 %v546
    %v586 = vunpack.c.l.b16 %v547
    %v587 = vunpack.c.l.b16 %v548
    %v588 = vunpack.c.l.b16 %v549
    %v589 = vunpack.c.l.b16 %v550
    %v590 = vunpack.c.l.b16 %v551
    %v591 = vunpack.c.l.b16 %v552
    %v592 = vunpack.c.l.b16 %v553
    %v593 = vunpack.c.l.b16 %v554
    %v594 = vpack.c.b16 %v579, %v578
    %v595 = vpack.c.b16 %v581, %v580
    %v596 = vpack.c.b16 %v583, %v582
    %v597 = vpack.c.b16 %v585, %v584
    %v598 = vpack.c.b16 %v587, %v586
    %v599 = vpack.c.b16 %v589, %v588
    %v600 = vpack.c.b16 %v591, %v590
    %v601 = vpack.c.b16 %v593, %v592
    %610 = vmatprep.subr.bf16.mxu0 0
    %611 = vmatpush1.bf16.msra.mxu0 %v594
    %612 = vmatprep.subr.bf16.mxu0 0
    %613 = vmatpush1.bf16.msra.mxu0 %v595
    %614 = vmatprep.subr.bf16.mxu0 0
    %615 = vmatpush1.bf16.msra.mxu0 %v596
    %616 = vmatprep.subr.bf16.mxu0 0
    %617 = vmatpush1.bf16.msra.mxu0 %v597
    %618 = vmatprep.subr.bf16.mxu0 0
    %619 = vmatpush1.bf16.msra.mxu0 %v598
    %620 = vmatprep.subr.bf16.mxu0 0
    %621 = vmatpush1.bf16.msra.mxu0 %v599
    %622 = vmatprep.subr.bf16.mxu0 0
    %623 = vmatpush1.bf16.msra.mxu0 %v600
    %624 = vmatprep.subr.bf16.mxu0 0
    %625 = vmatpush1.bf16.msra.mxu0 %v601
    %626 = vmatprep.subr.bf16.mxu0 0
    %627 = vmatpush1.bf16.msra.mxu0 0
    %628 = vmatprep.subr.bf16.mxu0 0
    %629 = vmatpush1.bf16.msra.mxu0 0
    %630 = vmatprep.subr.bf16.mxu0 0
    %631 = vmatpush1.bf16.msra.mxu0 0
    %632 = vmatprep.subr.bf16.mxu0 0
    %633 = vmatpush1.bf16.msra.mxu0 0
    %634 = vmatprep.subr.bf16.mxu0 0
    %635 = vmatpush1.bf16.msra.mxu0 0
    %636 = vmatprep.subr.bf16.mxu0 0
    %637 = vmatpush1.bf16.msra.mxu0 0
    %638 = vmatprep.subr.bf16.mxu0 0
    %639 = vmatpush1.bf16.msra.mxu0 0
    %640 = vmatprep.subr.bf16.mxu0 0
    %641 = vmatpush1.bf16.msra.mxu0 0
    %642 = vmatprep.mubr.bf16.mxu0 0
    %643 = vmatmul.mubr.bf16.gmra.mrb[0].mxu0 %v538
    %v644 = vpop.f32.mrb[0].mxu0
    %v645 = vadd.f32 %v560, %v644
    %v646 = vpop.f32.mrb[0].mxu0
    %v647 = vpop.f32.mrb[0].mxu0
    %v648 = vpop.f32.mrb[0].mxu0
    %649 = vdwg.mxu0
    %vm650 = vcmask 15360
    %651 = vst.msk [vmem:[%s6] sm:$0xff] %vm650, %v645
    // Predicated region
    $region30: #{tpu_custom_call.1} parent=1 // pred_check
      _
    $region31: #{tpu_custom_call.1} parent=1 // pred_check_branch
      %653 = sbr.rel (0) target = $region33
    $region32: #{tpu_custom_call.1} parent=1 // pred_region
      _
    $region33: #{tpu_custom_call.1} parent=1 // pred_fallthru
      _
    // Predicated region
    $region34: #{tpu_custom_call.1} parent=1 // pred_check
      _
    $region35: #{tpu_custom_call.1} parent=1 // pred_check_branch
      %655 = sbr.rel (0) target = $region37
    $region36: #{tpu_custom_call.1} parent=1 // pred_region
      _
    $region37: #{tpu_custom_call.1} parent=1 // pred_fallthru
      _
    %656 = vsyncpa [#allocation3], 1

</llo_original>
